<compile_context>
chip_gen: v7x
topology: tpu7x:2x2x1
jax: 0.10.0
libtpu: 0.0.40
codegen_flags: <defaults>
</compile_context>

<pallas_src>
import functools

import jax
import jax.numpy as jnp
from jax.experimental import pallas as pl
from jax.experimental.pallas import tpu as pltpu

BN_EPS = 1e-5


def _round_up(v, m):
    return ((v + m - 1) // m) * m


def _hw_config():
    """Generation-aware sizing: VMEM capacity/limit, lane alignment, tile caps."""
    vmem_bytes = None
    try:
        vmem_bytes = int(pltpu.get_tpu_info().vmem_capacity_bytes)
    except Exception:
        pass
    kind = ""
    try:
        kind = jax.devices()[0].device_kind.lower()
    except Exception:
        pass
    is_v7 = ("v7" in kind) or ("7x" in kind) or (
        vmem_bytes is not None and vmem_bytes <= 80 * 1024 * 1024)
    is_v6 = "v6" in kind
    if vmem_bytes is None:
        vmem_bytes = (64 if is_v7 else 128) * 1024 * 1024
    lane_align = 256 if (is_v7 or is_v6) else 128   # MXU is 2x256x256 on v6e/v7x
    if is_v7:
        caps = dict(bm=512, bn=512, bk=1024)        # keep footprint well < 64 MiB
    else:
        caps = dict(bm=512, bn=1024, bk=2048)       # 128 MiB VMEM on v5e/v6e
    vmem_limit = min(int(vmem_bytes * 3 // 4), 100 * 1024 * 1024)
    return dict(vmem_bytes=vmem_bytes, vmem_limit=vmem_limit,
                lane_align=lane_align, caps=caps, two_cores=is_v7)


def _choose_block(dim_pad, align, cap):
    """Largest multiple of `align` that divides dim_pad and is <= max(cap, align)."""
    if dim_pad <= cap:
        return dim_pad
    c = max((cap // align) * align, align)
    while c > align:
        if dim_pad % c == 0:
            return c
        c -= align
    return align


def _plan(M, K_pad, N_pad, compute_dtype, out_dtype, cfg,
          block_m=None, block_n=None, block_k=None):
    """Pick (M_pad, bm, bn, bk, has_acc) for this call."""
    dsize = jnp.dtype(compute_dtype).itemsize
    osize = jnp.dtype(out_dtype).itemsize
    m_sub = 16 if dsize == 2 else 8
    M_pad = _round_up(M, m_sub)
    align = cfg["lane_align"]
    caps = cfg["caps"]

    bm = block_m or _choose_block(M_pad, m_sub, caps["bm"])
    bn = block_n or _choose_block(N_pad, align, caps["bn"])
    bk = block_k or _choose_block(K_pad, align, caps["bk"])

    # v7x has 2 TensorCores: make sure there are >= 2 parallel (M, N) blocks.
    if cfg["two_cores"] and block_m is None and block_n is None:
        if (M_pad // bm) * (N_pad // bn) < 2:
            if N_pad >= 2 * align:
                bn = _choose_block(N_pad, align, N_pad // 2)
            elif M_pad >= 2 * m_sub:
                bm = _choose_block(M_pad, m_sub, M_pad // 2)

    # f32 outputs accumulate directly into the resident output block.
    has_acc = jnp.dtype(out_dtype) != jnp.dtype(jnp.float32)

    # Keep the double-buffered footprint inside the VMEM budget (defensive;
    # the caps above already fit comfortably).
    budget = int(cfg["vmem_limit"] * 0.8)

    def footprint(bm_, bn_, bk_):
        ins = 2 * (bm_ * bk_ + bk_ * bn_) * dsize
        outs = 2 * bm_ * bn_ * osize + (bm_ * bn_ * 4 if has_acc else 0)
        aux = 4 * 2 * bn_ * 4           # scale/shift streams (double-buffered)
        return ins + outs + aux

    while footprint(bm, bn, bk) > budget and bk > align:
        bk = _choose_block(K_pad, align, bk // 2)
    while footprint(bm, bn, bk) > budget and bn > align:
        bn = _choose_block(N_pad, align, bn // 2)
    while footprint(bm, bn, bk) > budget and bm > m_sub:
        bm = _choose_block(M_pad, m_sub, bm // 2)

    return M_pad, bm, bn, bk, has_acc


def _linear_kernel(*refs, use_bn, use_act, has_acc):
    if has_acc:
        acc_ref = refs[-1]
        refs = refs[:-1]
    if use_bn:
        x_ref, w_ref, scale_ref, shift_ref, o_ref = refs
    else:
        x_ref, w_ref, shift_ref, o_ref = refs
        scale_ref = None
    if not has_acc:
        acc_ref = o_ref          # f32 output tile doubles as the accumulator

    k = pl.program_id(2)

    @pl.when(k == 0)
    def _init():
        acc_ref[...] = jnp.zeros_like(acc_ref)

    # Hot loop: pure MXU matmul with f32 accumulation.
    acc_ref[...] += jnp.dot(x_ref[...], w_ref[...],
                            preferred_element_type=jnp.float32)

    @pl.when(k == pl.num_programs(2) - 1)
    def _epilogue():
        y = acc_ref[...]
        if use_bn:
            # bias + eval-mode BatchNorm1d folded into a single FMA.
            y = y * scale_ref[...] + shift_ref[...]
        else:
            y = y + shift_ref[...]          # shift == bias
        if use_act:
            y = jnp.maximum(y, 0.0)         # ReLU
        # TODO(synk): training-mode dropout (and batch-stat BN) not implemented;
        # forward matches module.eval() semantics where dropout is identity.
        o_ref[...] = y.astype(o_ref.dtype)


def prepare_params(params, *, use_bn=False, compute_dtype=jnp.float32):
    """One-time preprocessing, hoisted out of the per-call forward path:
       * fold bias + eval-mode BN into a per-feature (scale, shift) pair,
       * pad W^T / scale / shift to the MXU lane alignment and cast W^T to the
         compute dtype (so forward never re-streams the weight through HBM)."""
    cfg = _hw_config()
    align = cfg["lane_align"]
    K, N = params["w_t"].shape
    K_pad = _round_up(K, align)
    N_pad = _round_up(N, align)

    w_p = jnp.pad(params["w_t"].astype(compute_dtype),
                  ((0, K_pad - K), (0, N_pad - N)))
    b = params["b"].astype(jnp.float32)
    if use_bn:
        scale = (params["gamma"] *
                 jax.lax.rsqrt(params["var"] + BN_EPS)).astype(jnp.float32)
        shift = (b - params["mean"]) * scale + params["beta"]
        scale_p = jnp.pad(scale, ((0, 0), (0, N_pad - N)))
    else:
        scale_p = None
        shift = b
    shift_p = jnp.pad(shift.astype(jnp.float32), ((0, 0), (0, N_pad - N)))

    return dict(w_p=w_p, scale_p=scale_p, shift_p=shift_p,
                K=K, N=N, K_pad=K_pad, N_pad=N_pad, use_bn=use_bn,
                compute_dtype=jnp.dtype(compute_dtype), cfg=cfg)


def linear_forward(x, prepared, *, use_act=False, out_dtype=None,
                   block_m=None, block_n=None, block_k=None):
    """Fused Linear(+BN eval)(+ReLU) forward pass using pre-prepared params."""
    M, K = x.shape
    assert K == prepared["K"], "x inner dim must match in_features"
    cfg = prepared["cfg"]
    use_bn = prepared["use_bn"]
    compute_dtype = prepared["compute_dtype"]
    out_dtype = jnp.dtype(out_dtype) if out_dtype is not None else x.dtype
    K_pad, N_pad, N = prepared["K_pad"], prepared["N_pad"], prepared["N"]

    M_pad, bm, bn, bk, has_acc = _plan(M, K_pad, N_pad, compute_dtype,
                                       out_dtype, cfg,
                                       block_m, block_n, block_k)

    x_p = x.astype(compute_dtype)
    if (M_pad, K_pad) != (M, K):
        x_p = jnp.pad(x_p, ((0, M_pad - M), (0, K_pad - K)))

    grid = (M_pad // bm, N_pad // bn, K_pad // bk)

    in_specs = [
        pl.BlockSpec((bm, bk), lambda i, j, k: (i, k)),   # x tile
        pl.BlockSpec((bk, bn), lambda i, j, k: (k, j)),   # W^T tile
    ]
    inputs = [x_p, prepared["w_p"]]
    if use_bn:
        in_specs.append(pl.BlockSpec((1, bn), lambda i, j, k: (0, j)))   # scale
        inputs.append(prepared["scale_p"])
    in_specs.append(pl.BlockSpec((1, bn), lambda i, j, k: (0, j)))       # shift
    inputs.append(prepared["shift_p"])

    dsize = jnp.dtype(compute_dtype).itemsize
    osize = jnp.dtype(out_dtype).itemsize
    cost = pl.CostEstimate(
        flops=2 * M_pad * K_pad * N_pad,
        transcendentals=0,
        bytes_accessed=(M_pad * K_pad + K_pad * N_pad) * dsize
                       + M_pad * N_pad * osize,
    )

    kernel = functools.partial(_linear_kernel, use_bn=use_bn,
                               use_act=use_act, has_acc=has_acc)

    out = pl.pallas_call(
        kernel,
        out_shape=jax.ShapeDtypeStruct((M_pad, N_pad), out_dtype),
        grid_spec=pltpu.PrefetchScalarGridSpec(
            num_scalar_prefetch=0,
            grid=grid,
            in_specs=in_specs,
            out_specs=pl.BlockSpec((bm, bn), lambda i, j, k: (i, j)),
            scratch_shapes=([pltpu.VMEM((bm, bn), jnp.float32)]
                            if has_acc else []),
        ),
        compiler_params=pltpu.CompilerParams(
            dimension_semantics=("parallel", "parallel", "arbitrary"),
            vmem_limit_bytes=cfg["vmem_limit"],
        ),
        cost_estimate=cost,
    )(*inputs)

    return out[:M, :N]


def init_params(key, in_features, out_features, *, bh=False):
    """Deterministic parameter init mimicking PyTorch defaults."""
    kw, kb, kg, kbeta = jax.random.split(key, 4)
    bound = 1.0 / jnp.sqrt(jnp.float32(in_features))
    # nn.Linear weight: (out, in) uniform(-bound, bound); store transposed.
    w = jax.random.uniform(kw, (out_features, in_features), jnp.float32,
                           minval=-bound, maxval=bound)
    if bh:
        b = jnp.zeros((1, out_features), jnp.float32)  # bias=False when bh
    else:
        b = jax.random.uniform(kb, (1, out_features), jnp.float32,
                               minval=-bound, maxval=bound)
    return {
        "w_t": w.T,                                           # (K, N)
        "b": b,                                               # (1, N)
        "gamma": jax.random.uniform(kg, (1, out_features), jnp.float32,
                                    minval=0.5, maxval=1.5),
        "beta": 0.1 * jax.random.normal(kbeta, (1, out_features), jnp.float32),
        "mean": jnp.zeros((1, out_features), jnp.float32),    # BN running_mean
        "var": jnp.ones((1, out_features), jnp.float32),      # BN running_var
    }


def reference_forward(x, params, *, use_bn, use_act):
    y = x @ params["w_t"] + params["b"]
    if use_bn:
        y = (y - params["mean"]) / jnp.sqrt(params["var"] + BN_EPS)
        y = y * params["gamma"] + params["beta"]
    if use_act:
        y = jnp.maximum(y, 0.0)
    return y


if __name__ == "__main__":
    key = jax.random.PRNGKey(0)
    kx, kp1, kp2, kx3, kp3 = jax.random.split(key, 5)

    # Config 1: plain Linear with bias (bh=False, act=False, dropout=0).
    batch, in_f, out_f = 16, 32, 64
    x = jax.random.normal(kx, (batch, in_f), jnp.float32)
    p_plain = init_params(kp1, in_f, out_f, bh=False)
    prep_plain = prepare_params(p_plain, use_bn=False)
    y_plain = linear_forward(x, prep_plain, use_act=False)
    jax.block_until_ready(y_plain)
    ref_plain = reference_forward(x, p_plain, use_bn=False, use_act=False)
    assert jnp.allclose(y_plain, ref_plain, atol=1e-5, rtol=1e-5)

    # Config 2: bh=True (Linear no bias + BatchNorm1d) + ReLU + dropout (eval).
    p_bn = init_params(kp2, in_f, out_f, bh=True)
    prep_bn = prepare_params(p_bn, use_bn=True)
    y_bn = linear_forward(x, prep_bn, use_act=True)
    jax.block_until_ready(y_bn)
    ref_bn = reference_forward(x, p_bn, use_bn=True, use_act=True)
    assert jnp.allclose(y_bn, ref_bn, atol=1e-5, rtol=1e-5)

    # Config 3: non-aligned shapes -> exercises alignment padding and the
    # divisor-based tile planner (multi-step K reduction on 128-lane chips).
    M3, K3, N3 = 100, 700, 300
    x3 = jax.random.normal(kx3, (M3, K3), jnp.float32)
    p3 = init_params(kp3, K3, N3, bh=True)
    prep3 = prepare_params(p3, use_bn=True)
    y3 = linear_forward(x3, prep3, use_act=True)
    jax.block_until_ready(y3)
    ref3 = reference_forward(x3, p3, use_bn=True, use_act=True)
    assert jnp.allclose(y3, ref3, atol=1e-3, rtol=1e-3)

    # Config 4: bf16 MXU operands (fast path on all generations, incl. v5e),
    # f32 accumulation and f32 output.
    prep3_bf16 = prepare_params(p3, use_bn=True, compute_dtype=jnp.bfloat16)
    y_bf16 = linear_forward(x3, prep3_bf16, use_act=True)
    jax.block_until_ready(y_bf16)
    assert jnp.allclose(y_bf16, ref3, atol=0.2, rtol=0.05)

    print("KERNEL_OK")
</pallas_src>

<mosaic_0001>
module attributes {stable_mosaic.version = 11 : i64} {
  func.func @_linear_kernel(%arg0: i32, %arg1: i32, %arg2: i32, %arg3: memref<16x128xf32, #tpu.memory_space<vmem>>, %arg4: memref<128x128xf32, #tpu.memory_space<vmem>>, %arg5: memref<1x128xf32, #tpu.memory_space<vmem>>, %arg6: memref<16x128xf32, #tpu.memory_space<vmem>>) attributes {dimension_semantics = [#tpu.dimension_semantics<parallel>, #tpu.dimension_semantics<parallel>, #tpu.dimension_semantics<arbitrary>], iteration_bounds = array<i64: 1, 1, 1>, scalar_prefetch = 0 : i64, scratch_operands = 0 : i64, tpu.core_type = #tpu.core_type<tc>, window_params = [{transform_indices = @transform_0, window_bounds = array<i64: 16, 128>}, {transform_indices = @transform_1, window_bounds = array<i64: 128, 128>}, {transform_indices = @transform_2, window_bounds = array<i64: 1, 128>}, {transform_indices = @transform_3, window_bounds = array<i64: 16, 128>}]} {
    %c0_i32 = arith.constant 0 : i32
    %0 = arith.cmpi eq, %arg2, %c0_i32 : i32
    %1 = arith.extui %0 : i1 to i32
    %c0_i32_0 = arith.constant 0 : i32
    %2 = arith.cmpi ne, %1, %c0_i32_0 : i32
    scf.if %2 {
      %cst_10 = arith.constant 0.000000e+00 : f32
      %12 = vector.broadcast %cst_10 : f32 to vector<16x128xf32>
      %c0_11 = arith.constant 0 : index
      %c0_12 = arith.constant 0 : index
      %13 = vector.load %arg6[%c0_11, %c0_12] : memref<16x128xf32, #tpu.memory_space<vmem>>, vector<16x128xf32>
      tpu.vector_store %arg6[%c0_11, %c0_12], %12 {strides = array<i32>} : memref<16x128xf32, #tpu.memory_space<vmem>>, vector<16x128xf32>,
    } else {
    }
    %c0 = arith.constant 0 : index
    %c0_1 = arith.constant 0 : index
    %3 = vector.load %arg6[%c0, %c0_1] : memref<16x128xf32, #tpu.memory_space<vmem>>, vector<16x128xf32>
    %c0_2 = arith.constant 0 : index
    %c0_3 = arith.constant 0 : index
    %4 = vector.load %arg3[%c0_2, %c0_3] : memref<16x128xf32, #tpu.memory_space<vmem>>, vector<16x128xf32>
    %c0_4 = arith.constant 0 : index
    %c0_5 = arith.constant 0 : index
    %5 = vector.load %arg4[%c0_4, %c0_5] : memref<128x128xf32, #tpu.memory_space<vmem>>, vector<128x128xf32>
    %cst = arith.constant dense<0.000000e+00> : vector<16x128xf32>
    %6 = tpu.matmul %4, %5, %cst {dimension_numbers = #tpu.dot_dimension_numbers<[1], [0], [0], [1], [0, 0, 1, 1], [], []>} : vector<16x128xf32>, vector<128x128xf32>, vector<16x128xf32> -> vector<16x128xf32>
    %7 = arith.addf %3, %6 : vector<16x128xf32>
    %c0_6 = arith.constant 0 : index
    %c0_7 = arith.constant 0 : index
    %8 = vector.load %arg6[%c0_6, %c0_7] : memref<16x128xf32, #tpu.memory_space<vmem>>, vector<16x128xf32>
    tpu.vector_store %arg6[%c0_6, %c0_7], %7 {strides = array<i32>} : memref<16x128xf32, #tpu.memory_space<vmem>>, vector<16x128xf32>,
    %c0_i32_8 = arith.constant 0 : i32
    %9 = arith.cmpi eq, %arg2, %c0_i32_8 : i32
    %10 = arith.extui %9 : i1 to i32
    %c0_i32_9 = arith.constant 0 : i32
    %11 = arith.cmpi ne, %10, %c0_i32_9 : i32
    scf.if %11 {
      %c0_10 = arith.constant 0 : index
      %c0_11 = arith.constant 0 : index
      %12 = vector.load %arg6[%c0_10, %c0_11] : memref<16x128xf32, #tpu.memory_space<vmem>>, vector<16x128xf32>
      %c0_12 = arith.constant 0 : index
      %c0_13 = arith.constant 0 : index
      %13 = vector.load %arg5[%c0_12, %c0_13] : memref<1x128xf32, #tpu.memory_space<vmem>>, vector<1x128xf32>
      %14 = vector.broadcast %13 : vector<1x128xf32> to vector<16x128xf32>
      %15 = arith.addf %12, %14 : vector<16x128xf32>
      %c0_14 = arith.constant 0 : index
      %c0_15 = arith.constant 0 : index
      %16 = vector.load %arg6[%c0_14, %c0_15] : memref<16x128xf32, #tpu.memory_space<vmem>>, vector<16x128xf32>
      tpu.vector_store %arg6[%c0_14, %c0_15], %15 {strides = array<i32>} : memref<16x128xf32, #tpu.memory_space<vmem>>, vector<16x128xf32>,
    } else {
    }
    return
  }
  func.func @transform_0(%arg0: i32, %arg1: i32, %arg2: i32) -> (i32, i32) {
    %c0_i32 = arith.constant 0 : i32
    return %arg0, %arg2 : i32, i32
  }
  func.func @transform_1(%arg0: i32, %arg1: i32, %arg2: i32) -> (i32, i32) {
    %c0_i32 = arith.constant 0 : i32
    return %arg2, %arg1 : i32, i32
  }
  func.func @transform_2(%arg0: i32, %arg1: i32, %arg2: i32) -> (i32, i32) {
    %c0_i32 = arith.constant 0 : i32
    %c0_i32_0 = arith.constant 0 : i32
    return %c0_i32, %arg1 : i32, i32
  }
  func.func @transform_3(%arg0: i32, %arg1: i32, %arg2: i32) -> (i32, i32) {
    %c0_i32 = arith.constant 0 : i32
    return %arg0, %arg1 : i32, i32
  }
}

</mosaic_0001>

<llo_original>
// kernel: tpu_custom_call.1
$region0: #{tpu_custom_call.1}
  #allocation0 [shape = 'u32[]', space=smem, size = 0x4, offset = 0x4, fixed_abs, tag = 'smem constant byte address 0x4 - core index']
  #allocation1 [shape = 'u32[144,128]{1,0:T(1,128)}', space=vmem, size = 0x12000, scoped, tag = 'internal scratch']
  %s0 = inlined_call_operand.hbm [shape: f32[16,128], index: 0, kind: input, shape index: {}]
  %s1 = inlined_call_operand.hbm [shape: f32[128,128], index: 1, kind: input, shape index: {}]
  %s2 = inlined_call_operand.hbm [shape: f32[1,128], index: 2, kind: input, shape index: {}]
  %s3 = inlined_call_operand.hbm [shape: f32[16,128], index: 3, kind: output, shape index: {}]
  %s4 = sld [smem:[#allocation0]]
  $region42: #{tpu_custom_call.1} parent=0
    _
  %s6 = ssub.s32 1, %s4
  %s7 = scalar_select 0, %s6, %s4
  $region1: #{tpu_custom_call.1} parent=0
    #allocation2 [shape = 'u8[8192]{0}', space=vmem, size = 0x2000, scoped, tag = 'input window, operand 0, single buffered']
    #allocation3 [shape = 's32[1]{0}', space=sflag, size = 0x4, scoped, tag = 'scoped memory for tpu_custom_call.1']
    #allocation4 [shape = 's32[1]{0}', space=sflag, size = 0x4, scoped, tag = 'scoped memory for tpu_custom_call.1']
    #allocation5 [shape = 'u8[65536]{0}', space=vmem, size = 0x10000, scoped, tag = 'input window, operand 1, single buffered']
    #allocation6 [shape = 's32[1]{0}', space=sflag, size = 0x4, scoped, tag = 'scoped memory for tpu_custom_call.1']
    #allocation7 [shape = 'u8[512]{0}', space=vmem, size = 0x400, scoped, tag = 'input window, operand 2, single buffered']
    #allocation8 [shape = 'u8[8192]{0}', space=vmem, size = 0x2000, scoped, tag = 'output window, operand 0, single buffered']
    %8 = vsyncpa [#allocation3], 0
    %9 = vsyncpa [#allocation6], 0
    %10 = vsyncpa [#allocation4], 0
    // Predicated region
    $region2: #{tpu_custom_call.1} parent=1 // pred_check
      _
    $region3: #{tpu_custom_call.1} parent=1 // pred_check_branch
      %12 = sbr.rel (0) target = $region5
    $region4: #{tpu_custom_call.1} parent=1 // pred_region
      %s14 = ssub.s32 256, 256
      %15 = vsyncadd [#allocation3], %s14
      %s16 = sshll.u32 [#allocation2], 4
      %s17 = int_to_ptr.vmem [resolvable:$true] %s16
      %22 = dma.hbm_to_vmem [thread:$0]  %s0, 256, %s17, [#allocation3], 128, 128, 8
    $region5: #{tpu_custom_call.1} parent=1 // pred_fallthru
      _
    // Predicated region
    $region6: #{tpu_custom_call.1} parent=1 // pred_check
      _
    $region7: #{tpu_custom_call.1} parent=1 // pred_check_branch
      %24 = sbr.rel (0) target = $region9
    $region8: #{tpu_custom_call.1} parent=1 // pred_region
      %s26 = ssub.s32 2048, 2048
      %27 = vsyncadd [#allocation6], %s26
      %s28 = sshll.u32 [#allocation5], 4
      %s29 = int_to_ptr.vmem [resolvable:$true] %s28
      %34 = dma.hbm_to_vmem [thread:$0]  %s1, 2048, %s29, [#allocation6], 128, 128, 8
    $region9: #{tpu_custom_call.1} parent=1 // pred_fallthru
      _
    // Predicated region
    $region10: #{tpu_custom_call.1} parent=1 // pred_check
      _
    $region11: #{tpu_custom_call.1} parent=1 // pred_check_branch
      %36 = sbr.rel (0) target = $region13
    $region12: #{tpu_custom_call.1} parent=1 // pred_region
      %s38 = ssub.s32 16, 16
      %39 = vsyncadd [#allocation6], %s38
      %s41 = sshll.u32 [#allocation7], 4
      %s42 = int_to_ptr.vmem [resolvable:$true] %s41
      %44 = dma.hbm_to_vmem [thread:$0]  %s2, 16, %s42, [#allocation6]
    $region13: #{tpu_custom_call.1} parent=1 // pred_fallthru
      _
    // Predicated region
    $region14: #{tpu_custom_call.1} parent=1 // pred_check
      _
    $region15: #{tpu_custom_call.1} parent=1 // pred_check_branch
      %46 = sbr.rel (0) target = $region17
    $region16: #{tpu_custom_call.1} parent=1 // pred_region
      %47 = dma.done [#allocation3], 256
    $region17: #{tpu_custom_call.1} parent=1 // pred_fallthru
      _
    // Predicated region
    $region18: #{tpu_custom_call.1} parent=1 // pred_check
      _
    $region19: #{tpu_custom_call.1} parent=1 // pred_check_branch
      %49 = sbr.rel (0) target = $region21
    $region20: #{tpu_custom_call.1} parent=1 // pred_region
      %50 = dma.done [#allocation6], 2048
    $region21: #{tpu_custom_call.1} parent=1 // pred_fallthru
      _
    // Predicated region
    $region22: #{tpu_custom_call.1} parent=1 // pred_check
      _
    $region23: #{tpu_custom_call.1} parent=1 // pred_check_branch
      %52 = sbr.rel (0) target = $region25
    $region24: #{tpu_custom_call.1} parent=1 // pred_region
      %53 = dma.done [#allocation6], 16
    $region25: #{tpu_custom_call.1} parent=1 // pred_fallthru
      _
    %p54 = scmp.eq.s32.totalorder 0, 0
    // Predicated region
    $region26: #{tpu_custom_call.1} parent=1 // pred_check
      %p55 = pneg %p54
    $region27: #{tpu_custom_call.1} parent=1 // pred_check_branch
      %57 = sbr.rel (%p55) target = $region29
    $region28: #{tpu_custom_call.1} parent=1 // pred_region
      %58 = vst [vmem:[#allocation8] sm:$0xff] 0.0
      %59 = vst [vmem:[#allocation8 + $0x8] sm:$0xff] 0.0
    $region29: #{tpu_custom_call.1} parent=1 // pred_fallthru
      _
    %v60 = vld [vmem:[#allocation8] sm:$0xff]
    %v61 = vld [vmem:[#allocation8 + $0x8] sm:$0xff]
    %v62 = vld [vmem:[#allocation2] sm:$0xff]
    %v63 = vld [vmem:[#allocation2 + $0x8] sm:$0xff]
    %v64 = vld [vmem:[#allocation5] sm:$0xff]
    %v65 = vld [vmem:[#allocation5 + $0x8] sm:$0xff]
    %v66 = vld [vmem:[#allocation5 + $0x10] sm:$0xff]
    %v67 = vld [vmem:[#allocation5 + $0x18] sm:$0xff]
    %v68 = vld [vmem:[#allocation5 + $0x20] sm:$0xff]
    %v69 = vld [vmem:[#allocation5 + $0x28] sm:$0xff]
    %v70 = vld [vmem:[#allocation5 + $0x30] sm:$0xff]
    %v71 = vld [vmem:[#allocation5 + $0x38] sm:$0xff]
    %v72 = vld [vmem:[#allocation5 + $0x40] sm:$0xff]
    %v73 = vld [vmem:[#allocation5 + $0x48] sm:$0xff]
    %v74 = vld [vmem:[#allocation5 + $0x50] sm:$0xff]
    %v75 = vld [vmem:[#allocation5 + $0x58] sm:$0xff]
    %v76 = vld [vmem:[#allocation5 + $0x60] sm:$0xff]
    %v77 = vld [vmem:[#allocation5 + $0x68] sm:$0xff]
    %v78 = vld [vmem:[#allocation5 + $0x70] sm:$0xff]
    %v79 = vld [vmem:[#allocation5 + $0x78] sm:$0xff]
    %80 = vmatprep.subr.mxu0 0.0
    %81 = vmatpush1.msra.mxu0 %v64
    %82 = vmatprep.subr.mxu0 0.0
    %83 = vmatpush1.msra.mxu0 %v65
    %84 = vmatprep.subr.mxu0 0.0
    %85 = vmatpush1.msra.mxu0 %v66
    %86 = vmatprep.subr.mxu0 0.0
    %87 = vmatpush1.msra.mxu0 %v67
    %88 = vmatprep.subr.mxu0 0.0
    %89 = vmatpush1.msra.mxu0 %v68
    %90 = vmatprep.subr.mxu0 0.0
    %91 = vmatpush1.msra.mxu0 %v69
    %92 = vmatprep.subr.mxu0 0.0
    %93 = vmatpush1.msra.mxu0 %v70
    %94 = vmatprep.subr.mxu0 0.0
    %95 = vmatpush1.msra.mxu0 %v71
    %96 = vmatprep.subr.mxu0 0.0
    %97 = vmatpush1.msra.mxu0 %v72
    %98 = vmatprep.subr.mxu0 0.0
    %99 = vmatpush1.msra.mxu0 %v73
    %100 = vmatprep.subr.mxu0 0.0
    %101 = vmatpush1.msra.mxu0 %v74
    %102 = vmatprep.subr.mxu0 0.0
    %103 = vmatpush1.msra.mxu0 %v75
    %104 = vmatprep.subr.mxu0 0.0
    %105 = vmatpush1.msra.mxu0 %v76
    %106 = vmatprep.subr.mxu0 0.0
    %107 = vmatpush1.msra.mxu0 %v77
    %108 = vmatprep.subr.mxu0 0.0
    %109 = vmatpush1.msra.mxu0 %v78
    %110 = vmatprep.subr.mxu0 0.0
    %111 = vmatpush1.msra.mxu0 %v79
    %112 = vmatprep.subr.mxu0 0.0
    %113 = vmatpush1.msra.mxu0 0.0
    %114 = vmatprep.subr.mxu0 0.0
    %115 = vmatpush1.msra.mxu0 0.0
    %116 = vmatprep.subr.mxu0 0.0
    %117 = vmatpush1.msra.mxu0 0.0
    %118 = vmatprep.subr.mxu0 0.0
    %119 = vmatpush1.msra.mxu0 0.0
    %120 = vmatprep.subr.mxu0 0.0
    %121 = vmatpush1.msra.mxu0 0.0
    %122 = vmatprep.subr.mxu0 0.0
    %123 = vmatpush1.msra.mxu0 0.0
    %124 = vmatprep.subr.mxu0 0.0
    %125 = vmatpush1.msra.mxu0 0.0
    %126 = vmatprep.subr.mxu0 0.0
    %127 = vmatpush1.msra.mxu0 0.0
    %128 = vmatprep.subr.mxu0 0.0
    %129 = vmatpush1.msra.mxu0 0.0
    %130 = vmatprep.subr.mxu0 0.0
    %131 = vmatpush1.msra.mxu0 0.0
    %132 = vmatprep.subr.mxu0 0.0
    %133 = vmatpush1.msra.mxu0 0.0
    %134 = vmatprep.subr.mxu0 0.0
    %135 = vmatpush1.msra.mxu0 0.0
    %136 = vmatprep.subr.mxu0 0.0
    %137 = vmatpush1.msra.mxu0 0.0
    %138 = vmatprep.subr.mxu0 0.0
    %139 = vmatpush1.msra.mxu0 0.0
    %140 = vmatprep.subr.mxu0 0.0
    %141 = vmatpush1.msra.mxu0 0.0
    %142 = vmatprep.subr.mxu0 0.0
    %143 = vmatpush1.msra.mxu0 0.0
    %144 = vmatprep.mubr.f32.mxu0 0.0
    %145 = vmatmul.mubr.f32.gmra.mrb[0].mxu0 %v62
    %v146 = vpop.f32.mrb[0].mxu0
    %v147 = vadd.f32 0.0, %v146
    %v148 = vpop.f32.mrb[0].mxu0
    %149 = vmatprep.mubr.f32.mxu0 0.0
    %150 = vmatmul.mubr.f32.gmra.mrb[0].mxu0 %v63
    %v151 = vpop.f32.mrb[0].mxu0
    %v152 = vadd.f32 0.0, %v151
    %v153 = vpop.f32.mrb[0].mxu0
    %154 = vdwg.mxu0
    %v155 = vadd.f32 %v60, %v147
    %v156 = vadd.f32 %v61, %v152
    %157 = vst [vmem:[#allocation8] sm:$0xff] %v155
    %158 = vst [vmem:[#allocation8 + $0x8] sm:$0xff] %v156
    // Predicated region
    $region30: #{tpu_custom_call.1} parent=1 // pred_check
      %p159 = pneg %p54
    $region31: #{tpu_custom_call.1} parent=1 // pred_check_branch
      %161 = sbr.rel (%p159) target = $region33
    $region32: #{tpu_custom_call.1} parent=1 // pred_region
      %v162 = vld [vmem:[#allocation8] sm:$0xff]
      %v163 = vld [vmem:[#allocation8 + $0x8] sm:$0xff]
      %v164 = vld [vmem:[#allocation7] sm:$0x1]
      %v166 = vlaneseq
      %v167 = vshrl.u32 %v166, 7
      %v168 = vsub.s32 0, %v167
      %v169 = vrot.slane %v164, %v168
      %v171 = vadd.f32 %v162, %v169
      %v172 = vadd.f32 %v163, %v169
      %173 = vst [vmem:[#allocation8] sm:$0xff] %v171
      %174 = vst [vmem:[#allocation8 + $0x8] sm:$0xff] %v172
    $region33: #{tpu_custom_call.1} parent=1 // pred_fallthru
      _
    // Predicated region
    $region34: #{tpu_custom_call.1} parent=1 // pred_check
      _
    $region35: #{tpu_custom_call.1} parent=1 // pred_check_branch
      %176 = sbr.rel (0) target = $region37
    $region36: #{tpu_custom_call.1} parent=1 // pred_region
      %s178 = ssub.s32 256, 256
      %179 = vsyncadd [#allocation4], %s178
      %s180 = sshll.u32 [#allocation8], 4
      %s181 = int_to_ptr.vmem [resolvable:$true] %s180
      %186 = dma.vmem_to_hbm [thread:$0]  %s181, 256, %s3, [#allocation4], 128, 128, 8
    $region37: #{tpu_custom_call.1} parent=1 // pred_fallthru
      _
    // Predicated region
    $region38: #{tpu_custom_call.1} parent=1 // pred_check
      _
    $region39: #{tpu_custom_call.1} parent=1 // pred_check_branch
      %188 = sbr.rel (0) target = $region41
    $region40: #{tpu_custom_call.1} parent=1 // pred_region
      %189 = dma.done [#allocation4], 256
    $region41: #{tpu_custom_call.1} parent=1 // pred_fallthru
      _
    %190 = vsyncpa [#allocation3], 1
    %191 = vsyncpa [#allocation6], 1
    %192 = vsyncpa [#allocation4], 1

</llo_original>
